<compile_context>
chip_gen: v7x
topology: tpu7x:2x2x1
jax: 0.10.0
libtpu: 0.0.40
codegen_flags: <defaults>
</compile_context>

<pallas_src>
import jax
import jax.numpy as jnp
from jax.experimental import pallas as pl
from jax.experimental.pallas import tpu as pltpu

# ---- deterministic "module init" (weights of MultipleLoss) ------------------
LOSS_WEIGHTS = (0.5, 0.5)  # default: 1/len(losses) for [MSE, L1]

_LANES = 128
_ACC_ROWS = 8                      # (8,128) f32 partial-sum accumulator
_TARGET_BLOCK_BYTES = 2 * 1024 * 1024   # ~2 MiB of DMA per input block/step
_VMEM_LIMIT_BYTES = 32 * 1024 * 1024    # safe on v5e/v6e/v7x


def _make_kernel(tile_rows, valid_rows, mask_boundary):
    def accumulate(d, sse_ref, sae_ref):
        # VPU-only partial sums into the resident (8,128) output blocks; the
        # row-grouping reshape is sublane-tile aligned (tile_rows % 8 == 0).
        sq = (d * d).reshape(-1, _ACC_ROWS, _LANES)
        ab = jnp.abs(d).reshape(-1, _ACC_ROWS, _LANES)
        sse_ref[...] += jnp.sum(sq, axis=0)
        sae_ref[...] += jnp.sum(ab, axis=0)

    def kernel(p_ref, t_ref, sse_ref, sae_ref):
        i = pl.program_id(0)

        @pl.when(i == 0)
        def _init():
            sse_ref[...] = jnp.zeros_like(sse_ref)
            sae_ref[...] = jnp.zeros_like(sae_ref)

        # Cast in-register; bf16 inputs are read from HBM at half the bytes.
        d = p_ref[...].astype(jnp.float32) - t_ref[...].astype(jnp.float32)

        if mask_boundary:
            last = pl.num_programs(0) - 1

            # Fast path: every non-boundary step skips the mask entirely.
            @pl.when(i < last)
            def _fast():
                accumulate(d, sse_ref, sae_ref)

            # Slow path: only the final block contains OOB rows (undefined
            # data past the real array); zero them before accumulating.
            @pl.when(i == last)
            def _tail():
                row_ids = jax.lax.broadcasted_iota(jnp.int32, d.shape, 0)
                dm = jnp.where(i * tile_rows + row_ids < valid_rows, d, 0.0)
                accumulate(dm, sse_ref, sae_ref)
        else:
            accumulate(d, sse_ref, sae_ref)

    return kernel


def multiple_loss(predict, target, weights=LOSS_WEIGHTS,
                  target_block_bytes=_TARGET_BLOCK_BYTES, max_tile_rows=None):
    """0.5*MSE + 0.5*L1 (mean reduction), streamed through a Pallas TPU kernel."""
    assert predict.shape == target.shape, (predict.shape, target.shape)
    n = predict.size
    w_mse, w_l1 = float(weights[0]), float(weights[1])

    # Lane-dense 2-D view in the ORIGINAL dtype (reshape of a contiguous
    # array is free; no wrapper-side f32 cast copy).
    flat_p = predict.reshape(-1)
    flat_t = target.reshape(-1)
    chunk = _ACC_ROWS * _LANES  # 1024
    rem = n % chunk
    if rem:
        # TODO(synk): lane-ragged numel still pays one pad copy of both
        # tensors; a 1-D BlockSpec + flat-element-index tail mask would avoid
        # it, at the cost of a less favourable 1-D in-kernel layout.
        pad = chunk - rem
        flat_p = jnp.pad(flat_p, (0, pad))   # zero-pad both => zero diff
        flat_t = jnp.pad(flat_t, (0, pad))
    rows = flat_p.size // _LANES             # multiple of 8 by construction
    p2 = flat_p.reshape(rows, _LANES)
    t2 = flat_t.reshape(rows, _LANES)

    # Tile sized in bytes so bf16 gets 2x the rows of f32; rounded to a
    # multiple of 8 rows (the (8,128) divisibility rule), clamped to rows.
    itemsize = jnp.dtype(predict.dtype).itemsize
    tile_rows = int(target_block_bytes) // (_LANES * itemsize)
    if max_tile_rows is not None:
        tile_rows = min(tile_rows, int(max_tile_rows))
    tile_rows = max(8, (tile_rows // 8) * 8)
    tile_rows = min(tile_rows, rows)

    n_blocks = pl.cdiv(rows, tile_rows)
    mask_boundary = (rows % tile_rows) != 0

    kernel = _make_kernel(tile_rows, rows, mask_boundary)

    cost = pl.CostEstimate(
        flops=5 * n,
        transcendentals=0,
        bytes_accessed=2 * n * itemsize + 2 * _ACC_ROWS * _LANES * 4,
    )

    sse, sae = pl.pallas_call(
        kernel,
        out_shape=(
            jax.ShapeDtypeStruct((_ACC_ROWS, _LANES), jnp.float32),
            jax.ShapeDtypeStruct((_ACC_ROWS, _LANES), jnp.float32),
        ),
        grid_spec=pltpu.PrefetchScalarGridSpec(
            num_scalar_prefetch=0,
            grid=(n_blocks,),
            in_specs=[
                pl.BlockSpec((tile_rows, _LANES), lambda i: (i, 0)),
                pl.BlockSpec((tile_rows, _LANES), lambda i: (i, 0)),
            ],
            out_specs=[
                pl.BlockSpec((_ACC_ROWS, _LANES), lambda i: (0, 0)),
                pl.BlockSpec((_ACC_ROWS, _LANES), lambda i: (0, 0)),
            ],
        ),
        compiler_params=pltpu.CompilerParams(
            dimension_semantics=("arbitrary",),
            vmem_limit_bytes=_VMEM_LIMIT_BYTES,
        ),
        cost_estimate=cost,
    )(p2, t2)

    # Tiny epilogue: one cross-lane reduction per loss + weighted combine.
    return (w_mse * jnp.sum(sse) + w_l1 * jnp.sum(sae)) / float(n)


def multiple_loss_ref(predict, target, weights=LOSS_WEIGHTS):
    d = predict.astype(jnp.float32) - target.astype(jnp.float32)
    return weights[0] * jnp.mean(d * d) + weights[1] * jnp.mean(jnp.abs(d))


if __name__ == "__main__":
    key = jax.random.PRNGKey(0)
    k1, k2, k3, k4, k5, k6 = jax.random.split(key, 6)

    # Primary case: NCHW (2, 4, 16, 16), f32 (single-block fast path, no mask).
    predict = jax.random.normal(k1, (2, 4, 16, 16), dtype=jnp.float32)
    target = jax.random.normal(k2, (2, 4, 16, 16), dtype=jnp.float32)
    out = jax.block_until_ready(multiple_loss(predict, target))
    ref = multiple_loss_ref(predict, target)
    assert jnp.allclose(out, ref, rtol=1e-5, atol=1e-6), (out, ref)

    # Multi-step streaming accumulation, evenly dividing (no mask): rows=24,
    # tile=8 -> 3 grid steps.
    p3 = jax.random.normal(k3, (4, 3, 16, 16), dtype=jnp.float32)
    t3 = jax.random.normal(k4, (4, 3, 16, 16), dtype=jnp.float32)
    out3 = jax.block_until_ready(multiple_loss(p3, t3, max_tile_rows=8))
    ref3 = multiple_loss_ref(p3, t3)
    assert jnp.allclose(out3, ref3, rtol=1e-5, atol=1e-6), (out3, ref3)

    # Boundary-mask path: rows=24, tile=16 -> 2 steps, last block half OOB.
    out3m = jax.block_until_ready(multiple_loss(p3, t3, max_tile_rows=16))
    assert jnp.allclose(out3m, ref3, rtol=1e-5, atol=1e-6), (out3m, ref3)

    # bf16 inputs with numel not a multiple of 8*128 (pad + in-kernel cast).
    pb = jax.random.normal(k5, (1, 3, 17, 19), dtype=jnp.bfloat16)
    tb = jax.random.normal(k6, (1, 3, 17, 19), dtype=jnp.bfloat16)
    outb = jax.block_until_ready(multiple_loss(pb, tb))
    refb = multiple_loss_ref(pb, tb)
    assert jnp.allclose(outb, refb, rtol=1e-4, atol=1e-5), (outb, refb)

    print("KERNEL_OK")
</pallas_src>

<mosaic_0001>
module attributes {stable_mosaic.version = 11 : i64} {
  func.func @kernel(%arg0: i32, %arg1: memref<16x128xf32, #tpu.memory_space<vmem>>, %arg2: memref<16x128xf32, #tpu.memory_space<vmem>>, %arg3: memref<8x128xf32, #tpu.memory_space<vmem>>, %arg4: memref<8x128xf32, #tpu.memory_space<vmem>>) attributes {dimension_semantics = [#tpu.dimension_semantics<arbitrary>], iteration_bounds = array<i64: 1>, scalar_prefetch = 0 : i64, scratch_operands = 0 : i64, tpu.core_type = #tpu.core_type<tc>, window_params = [{transform_indices = @transform_0, window_bounds = array<i64: 16, 128>}, {transform_indices = @transform_1, window_bounds = array<i64: 16, 128>}, {pipeline_mode = #tpu.pipeline_mode<synchronous>, transform_indices = @transform_2, window_bounds = array<i64: 8, 128>}, {pipeline_mode = #tpu.pipeline_mode<synchronous>, transform_indices = @transform_3, window_bounds = array<i64: 8, 128>}]} {
    %c0_i32 = arith.constant 0 : i32
    %0 = arith.cmpi eq, %arg0, %c0_i32 : i32
    %1 = arith.extui %0 : i1 to i32
    %c0_i32_0 = arith.constant 0 : i32
    %2 = arith.cmpi ne, %1, %c0_i32_0 : i32
    scf.if %2 {
      %cst_13 = arith.constant 0.000000e+00 : f32
      %18 = vector.broadcast %cst_13 : f32 to vector<8x128xf32>
      %c0_14 = arith.constant 0 : index
      %c0_15 = arith.constant 0 : index
      %19 = vector.load %arg3[%c0_14, %c0_15] : memref<8x128xf32, #tpu.memory_space<vmem>>, vector<8x128xf32>
      tpu.vector_store %arg3[%c0_14, %c0_15], %18 {strides = array<i32>} : memref<8x128xf32, #tpu.memory_space<vmem>>, vector<8x128xf32>,
      %cst_16 = arith.constant 0.000000e+00 : f32
      %20 = vector.broadcast %cst_16 : f32 to vector<8x128xf32>
      %c0_17 = arith.constant 0 : index
      %c0_18 = arith.constant 0 : index
      %21 = vector.load %arg4[%c0_17, %c0_18] : memref<8x128xf32, #tpu.memory_space<vmem>>, vector<8x128xf32>
      tpu.vector_store %arg4[%c0_17, %c0_18], %20 {strides = array<i32>} : memref<8x128xf32, #tpu.memory_space<vmem>>, vector<8x128xf32>,
    } else {
    }
    %c0 = arith.constant 0 : index
    %c0_1 = arith.constant 0 : index
    %3 = vector.load %arg1[%c0, %c0_1] : memref<16x128xf32, #tpu.memory_space<vmem>>, vector<16x128xf32>
    %c0_2 = arith.constant 0 : index
    %c0_3 = arith.constant 0 : index
    %4 = vector.load %arg2[%c0_2, %c0_3] : memref<16x128xf32, #tpu.memory_space<vmem>>, vector<16x128xf32>
    %5 = arith.subf %3, %4 : vector<16x128xf32>
    %6 = arith.mulf %5, %5 : vector<16x128xf32>
    %7 = vector.shape_cast %6 : vector<16x128xf32> to vector<2x8x128xf32>
    %8 = math.absf %5 : vector<16x128xf32>
    %9 = vector.shape_cast %8 : vector<16x128xf32> to vector<2x8x128xf32>
    %c0_4 = arith.constant 0 : index
    %c0_5 = arith.constant 0 : index
    %10 = vector.load %arg3[%c0_4, %c0_5] : memref<8x128xf32, #tpu.memory_space<vmem>>, vector<8x128xf32>
    %cst = arith.constant dense<0.000000e+00> : vector<8x128xf32>
    %11 = vector.multi_reduction <add>, %7, %cst [0] : vector<2x8x128xf32> to vector<8x128xf32>
    %12 = arith.addf %10, %11 : vector<8x128xf32>
    %c0_6 = arith.constant 0 : index
    %c0_7 = arith.constant 0 : index
    %13 = vector.load %arg3[%c0_6, %c0_7] : memref<8x128xf32, #tpu.memory_space<vmem>>, vector<8x128xf32>
    tpu.vector_store %arg3[%c0_6, %c0_7], %12 {strides = array<i32>} : memref<8x128xf32, #tpu.memory_space<vmem>>, vector<8x128xf32>,
    %c0_8 = arith.constant 0 : index
    %c0_9 = arith.constant 0 : index
    %14 = vector.load %arg4[%c0_8, %c0_9] : memref<8x128xf32, #tpu.memory_space<vmem>>, vector<8x128xf32>
    %cst_10 = arith.constant dense<0.000000e+00> : vector<8x128xf32>
    %15 = vector.multi_reduction <add>, %9, %cst_10 [0] : vector<2x8x128xf32> to vector<8x128xf32>
    %16 = arith.addf %14, %15 : vector<8x128xf32>
    %c0_11 = arith.constant 0 : index
    %c0_12 = arith.constant 0 : index
    %17 = vector.load %arg4[%c0_11, %c0_12] : memref<8x128xf32, #tpu.memory_space<vmem>>, vector<8x128xf32>
    tpu.vector_store %arg4[%c0_11, %c0_12], %16 {strides = array<i32>} : memref<8x128xf32, #tpu.memory_space<vmem>>, vector<8x128xf32>,
    return
  }
  func.func @transform_0(%arg0: i32) -> (i32, i32) {
    %c0_i32 = arith.constant 0 : i32
    %c0_i32_0 = arith.constant 0 : i32
    return %arg0, %c0_i32 : i32, i32
  }
  func.func @transform_1(%arg0: i32) -> (i32, i32) {
    %c0_i32 = arith.constant 0 : i32
    %c0_i32_0 = arith.constant 0 : i32
    return %arg0, %c0_i32 : i32, i32
  }
  func.func @transform_2(%arg0: i32) -> (i32, i32) {
    %c0_i32 = arith.constant 0 : i32
    %c0_i32_0 = arith.constant 0 : i32
    %c0_i32_1 = arith.constant 0 : i32
    return %c0_i32, %c0_i32_0 : i32, i32
  }
  func.func @transform_3(%arg0: i32) -> (i32, i32) {
    %c0_i32 = arith.constant 0 : i32
    %c0_i32_0 = arith.constant 0 : i32
    %c0_i32_1 = arith.constant 0 : i32
    return %c0_i32, %c0_i32_0 : i32, i32
  }
}

</mosaic_0001>

<llo_original>
// kernel: tpu_custom_call.1
$region0: #{tpu_custom_call.1}
  #allocation0 [shape = 'u32[]', space=smem, size = 0x4, offset = 0x4, fixed_abs, tag = 'smem constant byte address 0x4 - core index']
  #allocation1 [shape = 'u32[144,128]{1,0:T(1,128)}', space=vmem, size = 0x12000, scoped, tag = 'internal scratch']
  %s0 = inlined_call_operand.hbm [shape: f32[16,128], index: 0, kind: input, shape index: {}]
  %s1 = inlined_call_operand.hbm [shape: f32[16,128], index: 1, kind: input, shape index: {}]
  %s2 = inlined_call_operand.hbm [shape: f32[8,128], index: 2, kind: output, shape index: {0}]
  %s3 = inlined_call_operand.hbm [shape: f32[8,128], index: 3, kind: output, shape index: {1}]
  %4 = xla_tuple %s2, %s3
  %s5 = sld [smem:[#allocation0]]
  $region38: #{tpu_custom_call.1} parent=0
    _
  %s7 = ssub.s32 1, %s5
  %s8 = scalar_select 0, %s7, %s5
  $region1: #{tpu_custom_call.1} parent=0
    #allocation2 [shape = 'u8[8192]{0}', space=vmem, size = 0x2000, scoped, tag = 'input window, operand 0, single buffered']
    #allocation3 [shape = 's32[1]{0}', space=sflag, size = 0x4, scoped, tag = 'scoped memory for tpu_custom_call.1']
    #allocation4 [shape = 's32[1]{0}', space=sflag, size = 0x4, scoped, tag = 'scoped memory for tpu_custom_call.1']
    #allocation5 [shape = 'u8[8192]{0}', space=vmem, size = 0x2000, scoped, tag = 'input window, operand 1, single buffered']
    #allocation6 [shape = 's32[1]{0}', space=sflag, size = 0x4, scoped, tag = 'scoped memory for tpu_custom_call.1']
    #allocation7 [shape = 'u8[4096]{0}', space=vmem, size = 0x1000, scoped, tag = 'output window, operand 0, single buffered']
    #allocation8 [shape = 'u8[4096]{0}', space=vmem, size = 0x1000, scoped, tag = 'output window, operand 1, single buffered']
    #allocation9 [shape = 's32[1]{0}', space=sflag, size = 0x4, scoped, tag = 'scoped memory for tpu_custom_call.1']
    %9 = vsyncpa [#allocation3], 0
    %10 = vsyncpa [#allocation6], 0
    %11 = vsyncpa [#allocation4], 0
    %12 = vsyncpa [#allocation9], 0
    // Predicated region
    $region2: #{tpu_custom_call.1} parent=1 // pred_check
      _
    $region3: #{tpu_custom_call.1} parent=1 // pred_check_branch
      %14 = sbr.rel (0) target = $region5
    $region4: #{tpu_custom_call.1} parent=1 // pred_region
      %s16 = ssub.s32 256, 256
      %17 = vsyncadd [#allocation3], %s16
      %s18 = sshll.u32 [#allocation2], 4
      %s19 = int_to_ptr.vmem [resolvable:$true] %s18
      %24 = dma.hbm_to_vmem [thread:$0]  %s0, 256, %s19, [#allocation3], 128, 128, 8
    $region5: #{tpu_custom_call.1} parent=1 // pred_fallthru
      _
    // Predicated region
    $region6: #{tpu_custom_call.1} parent=1 // pred_check
      _
    $region7: #{tpu_custom_call.1} parent=1 // pred_check_branch
      %26 = sbr.rel (0) target = $region9
    $region8: #{tpu_custom_call.1} parent=1 // pred_region
      %s28 = ssub.s32 256, 256
      %29 = vsyncadd [#allocation6], %s28
      %s30 = sshll.u32 [#allocation5], 4
      %s31 = int_to_ptr.vmem [resolvable:$true] %s30
      %36 = dma.hbm_to_vmem [thread:$0]  %s1, 256, %s31, [#allocation6], 128, 128, 8
    $region9: #{tpu_custom_call.1} parent=1 // pred_fallthru
      _
    // Predicated region
    $region10: #{tpu_custom_call.1} parent=1 // pred_check
      _
    $region11: #{tpu_custom_call.1} parent=1 // pred_check_branch
      %38 = sbr.rel (0) target = $region13
    $region12: #{tpu_custom_call.1} parent=1 // pred_region
      %39 = dma.done [#allocation3], 256
    $region13: #{tpu_custom_call.1} parent=1 // pred_fallthru
      _
    // Predicated region
    $region14: #{tpu_custom_call.1} parent=1 // pred_check
      _
    $region15: #{tpu_custom_call.1} parent=1 // pred_check_branch
      %41 = sbr.rel (0) target = $region17
    $region16: #{tpu_custom_call.1} parent=1 // pred_region
      %42 = dma.done [#allocation6], 256
    $region17: #{tpu_custom_call.1} parent=1 // pred_fallthru
      _
    %p43 = scmp.eq.s32.totalorder 0, 0
    // Predicated region
    $region18: #{tpu_custom_call.1} parent=1 // pred_check
      %p44 = pneg %p43
    $region19: #{tpu_custom_call.1} parent=1 // pred_check_branch
      %46 = sbr.rel (%p44) target = $region21
    $region20: #{tpu_custom_call.1} parent=1 // pred_region
      %47 = vst [vmem:[#allocation7] sm:$0xff] 0.0
      %48 = vst [vmem:[#allocation8] sm:$0xff] 0.0
    $region21: #{tpu_custom_call.1} parent=1 // pred_fallthru
      _
    %v49 = vld [vmem:[#allocation2] sm:$0xff]
    %v50 = vld [vmem:[#allocation2 + $0x8] sm:$0xff]
    %v51 = vld [vmem:[#allocation5] sm:$0xff]
    %v52 = vld [vmem:[#allocation5 + $0x8] sm:$0xff]
    %v53 = vsub.f32 %v49, %v51
    %v54 = vsub.f32 %v50, %v52
    %v55 = vmul.f32 %v53, %v53
    %v56 = vmul.f32 %v54, %v54
    %v57 = vand.u32 2147483647, %v53
    %v58 = vand.u32 2147483647, %v54
    %v59 = vld [vmem:[#allocation7] sm:$0xff]
    %v60 = vadd.f32 %v55, %v56
    %v61 = vadd.f32 %v59, %v60
    %62 = vst [vmem:[#allocation7] sm:$0xff] %v61
    %v63 = vld [vmem:[#allocation8] sm:$0xff]
    %v64 = vadd.f32 %v57, %v58
    %v65 = vadd.f32 %v63, %v64
    %66 = vst [vmem:[#allocation8] sm:$0xff] %v65
    // Predicated region
    $region22: #{tpu_custom_call.1} parent=1 // pred_check
      _
    $region23: #{tpu_custom_call.1} parent=1 // pred_check_branch
      %68 = sbr.rel (0) target = $region25
    $region24: #{tpu_custom_call.1} parent=1 // pred_region
      %s70 = ssub.s32 128, 128
      %71 = vsyncadd [#allocation4], %s70
      %s73 = sshll.u32 [#allocation7], 4
      %s74 = int_to_ptr.vmem [resolvable:$true] %s73
      %76 = dma.vmem_to_hbm [thread:$0]  %s74, 128, %s2, [#allocation4]
    $region25: #{tpu_custom_call.1} parent=1 // pred_fallthru
      _
    // Predicated region
    $region26: #{tpu_custom_call.1} parent=1 // pred_check
      _
    $region27: #{tpu_custom_call.1} parent=1 // pred_check_branch
      %78 = sbr.rel (0) target = $region29
    $region28: #{tpu_custom_call.1} parent=1 // pred_region
      %s80 = ssub.s32 128, 128
      %81 = vsyncadd [#allocation9], %s80
      %s83 = sshll.u32 [#allocation8], 4
      %s84 = int_to_ptr.vmem [resolvable:$true] %s83
      %86 = dma.vmem_to_hbm [thread:$0]  %s84, 128, %s3, [#allocation9]
    $region29: #{tpu_custom_call.1} parent=1 // pred_fallthru
      _
    // Predicated region
    $region30: #{tpu_custom_call.1} parent=1 // pred_check
      _
    $region31: #{tpu_custom_call.1} parent=1 // pred_check_branch
      %88 = sbr.rel (0) target = $region33
    $region32: #{tpu_custom_call.1} parent=1 // pred_region
      %89 = dma.done [#allocation4], 128
    $region33: #{tpu_custom_call.1} parent=1 // pred_fallthru
      _
    // Predicated region
    $region34: #{tpu_custom_call.1} parent=1 // pred_check
      _
    $region35: #{tpu_custom_call.1} parent=1 // pred_check_branch
      %91 = sbr.rel (0) target = $region37
    $region36: #{tpu_custom_call.1} parent=1 // pred_region
      %92 = dma.done [#allocation9], 128
    $region37: #{tpu_custom_call.1} parent=1 // pred_fallthru
      _
    %93 = vsyncpa [#allocation3], 1
    %94 = vsyncpa [#allocation6], 1
    %95 = vsyncpa [#allocation4], 1
    %96 = vsyncpa [#allocation9], 1

</llo_original>
